<compile_context>
chip_gen: v7x
topology: tpu7x:2x2x1
jax: 0.10.0
libtpu: 0.0.40
codegen_flags: <defaults>
</compile_context>

<pallas_src>
import math
import functools

import jax
import jax.numpy as jnp
from jax.experimental import pallas as pl
from jax.experimental.pallas import tpu as pltpu


_TARGET_TILE_BYTES = 2 * 1024 * 1024   # ~2 MiB emb tile: safe on every generation incl. v7x
_VMEM_LIMIT_BYTES = 32 * 1024 * 1024   # explicit scoped-VMEM budget (>= default everywhere)
_TINY_DECODE_BYTES = 256 * 1024        # below this a pallas_call is pure launch overhead


# ----------------------------- kernels ---------------------------------------


def _pos_enc_kernel(emb_ref, pe_ref, out_ref, *, scale):
    # f32 accumulate, cast on store (exact for f32 inputs; better rounding for bf16).
    x = emb_ref[...].astype(jnp.float32)
    p = pe_ref[...].astype(jnp.float32)        # (tS, D) or (tS, 1, D): broadcasts over batch
    out_ref[...] = (x * scale + p).astype(out_ref.dtype)


def _pos_enc_step_kernel(step_ref, emb_ref, pe_ref, out_ref, *, scale):
    # step_ref is the scalar-prefetch ref; it is only consumed by pe's index_map.
    del step_ref
    x = emb_ref[...].astype(jnp.float32)       # (tR, D) sublane-dense folded rows
    p = pe_ref[0].astype(jnp.float32)          # (1, D) pe row, broadcast over all rows
    out_ref[...] = (x * scale + p).astype(out_ref.dtype)


# ----------------------------- helpers ----------------------------------------


def _build_pe(dim: int, max_len: int) -> jnp.ndarray:
    """Sinusoidal table, identical math to the PyTorch __init__ (float32)."""
    position = jnp.arange(0, max_len, dtype=jnp.float32)[:, None]              # (max_len, 1)
    div_term = jnp.exp(
        jnp.arange(0, dim, 2, dtype=jnp.float32) * (-(math.log(10000.0) / dim))
    )                                                                           # (dim//2,)
    angles = position * div_term                                                # (max_len, dim//2)
    pe = jnp.zeros((max_len, dim), dtype=jnp.float32)
    pe = pe.at[:, 0::2].set(jnp.sin(angles))
    pe = pe.at[:, 1::2].set(jnp.cos(angles))
    return pe                                                                   # (max_len, dim)


def _seq_tile(S, B, D, itemsize):
    """Sequence-tile size for the 3-D path so one emb tile is ~_TARGET_TILE_BYTES."""
    rows = _TARGET_TILE_BYTES // max(1, B * D * itemsize)
    return max(1, min(S, rows))


def _row_tile(rows, D, itemsize):
    """Row-tile for 2-D folded layouts: multiple of 8 (sublane rule) or the full extent."""
    per_row = max(1, D * itemsize)
    t = max(8, (_TARGET_TILE_BYTES // per_row) // 8 * 8)
    return rows if t >= rows else t


def _cost(n_elems, bytes_accessed):
    return pl.CostEstimate(flops=2 * n_elems, transcendentals=0,
                           bytes_accessed=int(bytes_accessed))


# ----------------------------- module -----------------------------------------


class PositionalEncoding:
    """Sinusoidal positional encoding. Dropout is applied as identity (eval mode)."""

    def __init__(self, dim: int, dropout: float, max_len: int = 5000):
        if dim % 2 != 0:
            raise ValueError(f"sin/cos positional encoding needs even dim, got {dim}")
        self.dim = dim
        self.dropout = dropout            # NOTE: eval-mode identity (see TODO at top)
        self.max_len = max_len
        pe32 = _build_pe(dim, max_len)    # (max_len, dim) float32
        self._pe32_2d = pe32
        self._pe_cache = {}               # dtype -> (pe_2d, pe_3d) dtype-matched copies
        self.pe = pe32[:, None, :]        # (max_len, 1, dim), same layout as the torch buffer

    def _pe_for(self, dtype):
        dt = jnp.dtype(dtype)
        if dt not in self._pe_cache:
            pe2 = self._pe32_2d if dt == jnp.dtype(jnp.float32) else self._pe32_2d.astype(dt)
            self._pe_cache[dt] = (pe2, pe2[:, None, :])
        return self._pe_cache[dt]

    def __call__(self, emb: jnp.ndarray, step=None, force_pallas: bool = False) -> jnp.ndarray:
        # emb: (seq_len, batch, dim)
        S, B, D = emb.shape
        assert D == self.dim
        scale = math.sqrt(self.dim)
        itemsize = jnp.dtype(emb.dtype).itemsize
        pe_2d, pe_3d = self._pe_for(emb.dtype)     # dtype-matched table (f32 accumulate in-kernel)
        pe_item = pe_2d.dtype.itemsize
        n = S * B * D
        kernel = functools.partial(_pos_enc_kernel, scale=scale)
        cparams = pltpu.CompilerParams(
            dimension_semantics=("parallel",),
            vmem_limit_bytes=_VMEM_LIMIT_BYTES,
        )

        # ---------------- decode path: add pe[step] to every row --------------------
        if step is not None:
            step_i = jnp.clip(jnp.asarray(step, dtype=jnp.int32), 0, self.max_len - 1)
            if (not force_pallas) and n * itemsize < _TINY_DECODE_BYTES:
                # Tiny decode tensor: a pallas_call is pure launch overhead -> fused jnp add.
                pe_row = jax.lax.dynamic_slice_in_dim(self._pe32_2d, step_i, 1, axis=0)  # (1, D)
                return (emb.astype(jnp.float32) * scale + pe_row[None]).astype(emb.dtype)

            rows = S * B
            emb2 = emb.reshape(rows, D)            # sublane-dense fold (every row gets pe[step])
            tR = _row_tile(rows, D, itemsize)
            bytes_acc = 2 * rows * D * itemsize + D * pe_item
            out2 = pl.pallas_call(
                functools.partial(_pos_enc_step_kernel, scale=scale),
                out_shape=jax.ShapeDtypeStruct((rows, D), emb.dtype),
                grid_spec=pltpu.PrefetchScalarGridSpec(
                    num_scalar_prefetch=1,
                    grid=(pl.cdiv(rows, tR),),
                    in_specs=[
                        pl.BlockSpec((tR, D), lambda i, step_ref: (i, 0)),
                        # pe row selected directly from the prefetched (clamped) step scalar
                        pl.BlockSpec((1, 1, D), lambda i, step_ref: (step_ref[0], 0, 0)),
                    ],
                    out_specs=pl.BlockSpec((tR, D), lambda i, step_ref: (i, 0)),
                ),
                compiler_params=cparams,
                cost_estimate=_cost(n, bytes_acc),
            )(step_i.reshape((1,)), emb2, pe_3d)
            return out2.reshape(S, B, D)

        # ---------------- B == 1 fast path: sublane-dense 2-D (needs S % 8 == 0) ----
        if B == 1 and S % 8 == 0:
            emb2 = emb.reshape(S, D)               # free reshape (contiguous)
            tS = _row_tile(S, D, itemsize)         # multiple of 8 or the full extent
            bytes_acc = 2 * S * D * itemsize + S * D * pe_item
            out2 = pl.pallas_call(
                kernel,
                out_shape=jax.ShapeDtypeStruct((S, D), emb.dtype),
                grid_spec=pltpu.PrefetchScalarGridSpec(
                    num_scalar_prefetch=0,
                    grid=(pl.cdiv(S, tS),),
                    in_specs=[
                        pl.BlockSpec((tS, D), lambda i: (i, 0)),
                        pl.BlockSpec((tS, D), lambda i: (i, 0)),   # rows of the full pe table
                    ],
                    out_specs=pl.BlockSpec((tS, D), lambda i: (i, 0)),
                ),
                compiler_params=cparams,
                cost_estimate=_cost(n, bytes_acc),
            )(emb2, pe_2d)
            return out2.reshape(S, 1, D)

        # ---------------- general 3-D path (seq-tiled, pe broadcast over batch) -----
        # NOTE: with 1 < B < 8 (or D not a multiple of 128) the (B, D) trailing layout pays
        # ~(8/B)x in masked sublane stores and wasted vreg occupancy.  For typical training
        # shapes (B >= 8, D multiple of 128) this path is already lane/sublane dense.
        # TODO(synk): fold small B into the lane axis when D is small (needs a relayout pass).
        tS = _seq_tile(S, B, D, itemsize)
        bytes_acc = 2 * n * itemsize + S * D * pe_item
        return pl.pallas_call(
            kernel,
            out_shape=jax.ShapeDtypeStruct((S, B, D), emb.dtype),
            grid_spec=pltpu.PrefetchScalarGridSpec(
                num_scalar_prefetch=0,
                grid=(pl.cdiv(S, tS),),
                in_specs=[
                    pl.BlockSpec((tS, B, D), lambda i: (i, 0, 0)),
                    # rows [i*tS, i*tS+tS) of the full (max_len, 1, D) pe table
                    pl.BlockSpec((tS, 1, D), lambda i: (i, 0, 0)),
                ],
                out_specs=pl.BlockSpec((tS, B, D), lambda i: (i, 0, 0)),
            ),
            compiler_params=cparams,
            cost_estimate=_cost(n, bytes_acc),
        )(emb, pe_3d)


# ----------------------------- self-test --------------------------------------

if __name__ == "__main__":
    key = jax.random.PRNGKey(0)
    k1, k2, k3, k4 = jax.random.split(key, 4)

    dim = 32
    pos_enc = PositionalEncoding(dim=dim, dropout=0.1, max_len=64)
    scale = math.sqrt(dim)

    # 1) general 3-D path (seq=8, batch=2)
    emb = jax.random.normal(k1, (8, 2, dim), dtype=jnp.float32)
    out = jax.block_until_ready(pos_enc(emb))
    ref = emb * scale + pos_enc.pe[:8]
    assert jnp.allclose(out, ref, atol=1e-5, rtol=1e-5), "3-D path mismatch"

    # 2) decode/step path, tiny tensor -> fused jnp fallback
    emb_step = emb[:1]
    out_step = jax.block_until_ready(pos_enc(emb_step, step=3))
    ref_step = emb_step * scale + pos_enc.pe[3]
    assert jnp.allclose(out_step, ref_step, atol=1e-5, rtol=1e-5), "decode (jnp) mismatch"

    # 3) decode/step path through the Pallas kernel (sublane-dense (S*B, D) fold)
    out_step_p = jax.block_until_ready(pos_enc(emb_step, step=3, force_pallas=True))
    assert jnp.allclose(out_step_p, ref_step, atol=1e-5, rtol=1e-5), "decode (pallas) mismatch"

    # 4) batch == 1 sublane-dense 2-D fast path
    emb_b1 = jax.random.normal(k2, (16, 1, dim), dtype=jnp.float32)
    out_b1 = jax.block_until_ready(pos_enc(emb_b1))
    ref_b1 = emb_b1 * scale + pos_enc.pe[:16]
    assert jnp.allclose(out_b1, ref_b1, atol=1e-5, rtol=1e-5), "B==1 fast-path mismatch"

    # 5) bf16 input -> dtype-matched pe table streamed, f32 accumulation in-kernel
    emb_bf16 = jax.random.normal(k3, (32, 4, dim), dtype=jnp.float32).astype(jnp.bfloat16)
    out_bf16 = jax.block_until_ready(pos_enc(emb_bf16))
    pe_bf16 = pos_enc.pe[:32].astype(jnp.bfloat16)
    ref_bf16 = (emb_bf16.astype(jnp.float32) * scale
                + pe_bf16.astype(jnp.float32)).astype(jnp.bfloat16)
    assert jnp.allclose(out_bf16.astype(jnp.float32), ref_bf16.astype(jnp.float32),
                        atol=1e-2, rtol=1e-2), "bf16 path mismatch"

    # 6) multi-tile grid (exercises the pipelined streaming path; ~4 MiB input)
    pos_enc_big = PositionalEncoding(dim=128, dropout=0.0, max_len=1024)
    emb_big = jax.random.normal(k4, (1024, 8, 128), dtype=jnp.float32)
    out_big = jax.block_until_ready(pos_enc_big(emb_big))
    ref_big = emb_big * math.sqrt(128) + pos_enc_big.pe[:1024]
    assert jnp.allclose(out_big, ref_big, atol=1e-4, rtol=1e-5), "multi-tile mismatch"

    print("KERNEL_OK")
</pallas_src>

<mosaic_0001>
module attributes {stable_mosaic.version = 11 : i64} {
  func.func @_pos_enc_kernel(%arg0: i32, %arg1: memref<8x2x32xf32, #tpu.memory_space<vmem>>, %arg2: memref<8x1x32xf32, #tpu.memory_space<vmem>>, %arg3: memref<8x2x32xf32, #tpu.memory_space<vmem>>) attributes {dimension_semantics = [#tpu.dimension_semantics<parallel>], iteration_bounds = array<i64: 1>, scalar_prefetch = 0 : i64, scratch_operands = 0 : i64, tpu.core_type = #tpu.core_type<tc>, window_params = [{transform_indices = @transform_0, window_bounds = array<i64: 8, 2, 32>}, {transform_indices = @transform_1, window_bounds = array<i64: 8, 1, 32>}, {transform_indices = @transform_2, window_bounds = array<i64: 8, 2, 32>}]} {
    %c0 = arith.constant 0 : index
    %c0_0 = arith.constant 0 : index
    %c0_1 = arith.constant 0 : index
    %0 = vector.load %arg1[%c0, %c0_0, %c0_1] : memref<8x2x32xf32, #tpu.memory_space<vmem>>, vector<8x2x32xf32>
    %c0_2 = arith.constant 0 : index
    %c0_3 = arith.constant 0 : index
    %c0_4 = arith.constant 0 : index
    %1 = vector.load %arg2[%c0_2, %c0_3, %c0_4] : memref<8x1x32xf32, #tpu.memory_space<vmem>>, vector<8x1x32xf32>
    %cst = arith.constant 5.65685415 : f32
    %2 = vector.broadcast %cst : f32 to vector<8x2x32xf32>
    %3 = arith.mulf %0, %2 : vector<8x2x32xf32>
    %4 = vector.broadcast %1 : vector<8x1x32xf32> to vector<8x2x32xf32>
    %5 = arith.addf %3, %4 : vector<8x2x32xf32>
    %c0_5 = arith.constant 0 : index
    %c0_6 = arith.constant 0 : index
    %c0_7 = arith.constant 0 : index
    %6 = vector.load %arg3[%c0_5, %c0_6, %c0_7] : memref<8x2x32xf32, #tpu.memory_space<vmem>>, vector<8x2x32xf32>
    tpu.vector_store %arg3[%c0_5, %c0_6, %c0_7], %5 {strides = array<i32>} : memref<8x2x32xf32, #tpu.memory_space<vmem>>, vector<8x2x32xf32>,
    return
  }
  func.func @transform_0(%arg0: i32) -> (i32, i32, i32) {
    %c0_i32 = arith.constant 0 : i32
    %c0_i32_0 = arith.constant 0 : i32
    %c0_i32_1 = arith.constant 0 : i32
    return %arg0, %c0_i32, %c0_i32_0 : i32, i32, i32
  }
  func.func @transform_1(%arg0: i32) -> (i32, i32, i32) {
    %c0_i32 = arith.constant 0 : i32
    %c0_i32_0 = arith.constant 0 : i32
    %c0_i32_1 = arith.constant 0 : i32
    return %arg0, %c0_i32, %c0_i32_0 : i32, i32, i32
  }
  func.func @transform_2(%arg0: i32) -> (i32, i32, i32) {
    %c0_i32 = arith.constant 0 : i32
    %c0_i32_0 = arith.constant 0 : i32
    %c0_i32_1 = arith.constant 0 : i32
    return %arg0, %c0_i32, %c0_i32_0 : i32, i32, i32
  }
}

</mosaic_0001>

<llo_original>
// kernel: tpu_custom_call.1
$region0: #{tpu_custom_call.1}
  #allocation0 [shape = 'u32[]', space=smem, size = 0x4, offset = 0x4, fixed_abs, tag = 'smem constant byte address 0x4 - core index']
  #allocation1 [shape = 'u32[144,128]{1,0:T(1,128)}', space=vmem, size = 0x12000, scoped, tag = 'internal scratch']
  %s0 = inlined_call_operand.vmem [shape: f32[8,2,32], index: 0, kind: input, shape index: {}]
  %s1 = inlined_call_operand.vmem [shape: f32[64,1,32], index: 1, kind: input, shape index: {}]
  %s2 = inlined_call_operand.hbm [shape: f32[8,2,32], index: 2, kind: output, shape index: {}]
  %s3 = sld [smem:[#allocation0]]
  $region18: #{tpu_custom_call.1} parent=0
    _
  %s5 = ssub.s32 1, %s3
  %s6 = scalar_select 0, %s5, %s3
  $region1: #{tpu_custom_call.1} parent=0
    #allocation2 [shape = 'u8[8192]{0}', space=vmem, size = 0x2000, scoped, tag = 'output window, operand 0, single buffered']
    #allocation3 [shape = 's32[1]{0}', space=sflag, size = 0x4, scoped, tag = 'scoped memory for tpu_custom_call.1']
    %7 = vsyncpa [#allocation3], 0
    // Predicated region
    $region2: #{tpu_custom_call.1} parent=1 // pred_check
      _
    $region3: #{tpu_custom_call.1} parent=1 // pred_check_branch
      %9 = sbr.rel (0) target = $region5
    $region4: #{tpu_custom_call.1} parent=1 // pred_region
      _
    $region5: #{tpu_custom_call.1} parent=1 // pred_fallthru
      _
    // Predicated region
    $region6: #{tpu_custom_call.1} parent=1 // pred_check
      _
    $region7: #{tpu_custom_call.1} parent=1 // pred_check_branch
      %11 = sbr.rel (0) target = $region9
    $region8: #{tpu_custom_call.1} parent=1 // pred_region
      _
    $region9: #{tpu_custom_call.1} parent=1 // pred_fallthru
      _
    %v12 = vld [vmem:[%s0] sm:$0x3]
    %v13 = vld [vmem:[%s0 + $0x2] sm:$0x3]
    %v14 = vld [vmem:[%s0 + $0x4] sm:$0x3]
    %v15 = vld [vmem:[%s0 + $0x6] sm:$0x3]
    %v16 = vld [vmem:[%s0 + $0x8] sm:$0x3]
    %v17 = vld [vmem:[%s0 + $0xa] sm:$0x3]
    %v18 = vld [vmem:[%s0 + $0xc] sm:$0x3]
    %v19 = vld [vmem:[%s0 + $0xe] sm:$0x3]
    %v20 = vld [vmem:[%s1] sm:$0x1]
    %v21 = vld [vmem:[%s1 + $0x1] sm:$0x1]
    %v22 = vld [vmem:[%s1 + $0x2] sm:$0x1]
    %v23 = vld [vmem:[%s1 + $0x3] sm:$0x1]
    %v24 = vld [vmem:[%s1 + $0x4] sm:$0x1]
    %v25 = vld [vmem:[%s1 + $0x5] sm:$0x1]
    %v26 = vld [vmem:[%s1 + $0x6] sm:$0x1]
    %v27 = vld [vmem:[%s1 + $0x7] sm:$0x1]
    %v28 = vmul.f32 %v12, 5.656854
    %v29 = vmul.f32 %v13, 5.656854
    %v30 = vmul.f32 %v14, 5.656854
    %v31 = vmul.f32 %v15, 5.656854
    %v32 = vmul.f32 %v16, 5.656854
    %v33 = vmul.f32 %v17, 5.656854
    %v34 = vmul.f32 %v18, 5.656854
    %v35 = vmul.f32 %v19, 5.656854
    %v44 = vlaneseq
    %v45 = vshrl.u32 %v44, 7
    %v46 = vsub.s32 0, %v45
    %v47 = vrot.slane %v20, %v46
    %v48 = vlaneseq
    %v49 = vshrl.u32 %v48, 7
    %v50 = vsub.s32 0, %v49
    %v51 = vrot.slane %v21, %v50
    %v52 = vlaneseq
    %v53 = vshrl.u32 %v52, 7
    %v54 = vsub.s32 0, %v53
    %v55 = vrot.slane %v22, %v54
    %v56 = vlaneseq
    %v57 = vshrl.u32 %v56, 7
    %v58 = vsub.s32 0, %v57
    %v59 = vrot.slane %v23, %v58
    %v60 = vlaneseq
    %v61 = vshrl.u32 %v60, 7
    %v62 = vsub.s32 0, %v61
    %v63 = vrot.slane %v24, %v62
    %v64 = vlaneseq
    %v65 = vshrl.u32 %v64, 7
    %v66 = vsub.s32 0, %v65
    %v67 = vrot.slane %v25, %v66
    %v68 = vlaneseq
    %v69 = vshrl.u32 %v68, 7
    %v70 = vsub.s32 0, %v69
    %v71 = vrot.slane %v26, %v70
    %v72 = vlaneseq
    %v73 = vshrl.u32 %v72, 7
    %v74 = vsub.s32 0, %v73
    %v75 = vrot.slane %v27, %v74
    %v84 = vadd.f32 %v28, %v47
    %v85 = vadd.f32 %v29, %v51
    %v86 = vadd.f32 %v30, %v55
    %v87 = vadd.f32 %v31, %v59
    %v88 = vadd.f32 %v32, %v63
    %v89 = vadd.f32 %v33, %v67
    %v90 = vadd.f32 %v34, %v71
    %v91 = vadd.f32 %v35, %v75
    %vm92 = vcmask 254976
    %93 = vst.msk [vmem:[#allocation2] sm:$0x3] %vm92, %v84
    %94 = vst.msk [vmem:[#allocation2 + $0x2] sm:$0x3] %vm92, %v85
    %95 = vst.msk [vmem:[#allocation2 + $0x4] sm:$0x3] %vm92, %v86
    %96 = vst.msk [vmem:[#allocation2 + $0x6] sm:$0x3] %vm92, %v87
    %97 = vst.msk [vmem:[#allocation2 + $0x8] sm:$0x3] %vm92, %v88
    %98 = vst.msk [vmem:[#allocation2 + $0xa] sm:$0x3] %vm92, %v89
    %99 = vst.msk [vmem:[#allocation2 + $0xc] sm:$0x3] %vm92, %v90
    %100 = vst.msk [vmem:[#allocation2 + $0xe] sm:$0x3] %vm92, %v91
    // Predicated region
    $region10: #{tpu_custom_call.1} parent=1 // pred_check
      _
    $region11: #{tpu_custom_call.1} parent=1 // pred_check_branch
      %102 = sbr.rel (0) target = $region13
    $region12: #{tpu_custom_call.1} parent=1 // pred_region
      %s104 = ssub.s32 256, 256
      %105 = vsyncadd [#allocation3], %s104
      %s106 = sshll.u32 [#allocation2], 4
      %s107 = int_to_ptr.vmem [resolvable:$true] %s106
      %112 = dma.vmem_to_hbm [thread:$0]  %s107, 256, %s2, [#allocation3], 32, 32, 2
    $region13: #{tpu_custom_call.1} parent=1 // pred_fallthru
      _
    // Predicated region
    $region14: #{tpu_custom_call.1} parent=1 // pred_check
      _
    $region15: #{tpu_custom_call.1} parent=1 // pred_check_branch
      %114 = sbr.rel (0) target = $region17
    $region16: #{tpu_custom_call.1} parent=1 // pred_region
      %115 = dma.done [#allocation3], 256
    $region17: #{tpu_custom_call.1} parent=1 // pred_fallthru
      _
    %116 = vsyncpa [#allocation3], 1

</llo_original>
